<compile_context>
chip_gen: v7x
topology: tpu7x:2x2x1
jax: 0.10.0
libtpu: 0.0.40
codegen_flags: <defaults>
</compile_context>

<pallas_src>
import math
from functools import partial

import numpy as np
import jax
import jax.numpy as jnp
from jax.experimental import pallas as pl
from jax.experimental.pallas import tpu as pltpu

VMEM = pltpu.MemorySpace.VMEM

_VMEM_BUDGET = 40 * 1024 * 1024     # per-kernel tile working set (v7x-safe)
_VMEM_LIMIT = 48 * 1024 * 1024      # scoped VMEM limit handed to Mosaic


# ----------------------------------------------------------------------------
# Kernel 1: tiled graph propagation   O = G @ E   (replaces torch_sparse.spmm)
# ----------------------------------------------------------------------------
def _propagate_kernel(g_ref, e_ref, o_ref, *, tk, slice_e):
    k = pl.program_id(1)
    if slice_e:
        # E is full-K resident in VMEM; pick this step's K-slab.
        start = pl.multiple_of(k * tk, tk)
        e = e_ref[pl.ds(start, tk), :]
    else:
        e = e_ref[...]
    prod = jnp.dot(g_ref[...], e, preferred_element_type=jnp.float32)

    # Accumulate directly into the resident f32 output block (no scratch).
    @pl.when(k == 0)
    def _():
        o_ref[...] = prod

    @pl.when(k != 0)
    def _():
        o_ref[...] += prod


def _choose_tiles(np_, dpad):
    """Pick (tm, tk, e_resident) for G @ E.

    np_ is the padded node count (multiple of 256), dpad the lane-dense RHS
    width (multiple of 128).  Budget assumes double-buffered BlockSpec DMAs
    and stays under ~40 MiB so the kernel fits v7x's 64 MiB/TC VMEM while
    still letting v5e/v6e use big tiles (fewer per-step overheads on the
    HBM-bound G read).
    """
    row_tiles = [t for t in (2048, 1024, 512, 256, 128, 64, 32, 16, 8)
                 if np_ % t == 0]
    col_tiles = [t for t in (4096, 2048, 1024, 512, 256, 128)
                 if np_ % t == 0]
    if not col_tiles:
        col_tiles = [np_]
    # Prefer an even (>=2) number of row blocks so megacore (v7x) splits the
    # "parallel" row axis evenly across its two TensorCores.
    row_pref = [t for t in row_tiles if (np_ // t) >= 2 and (np_ // t) % 2 == 0]
    row_pref = row_pref or row_tiles

    def fits(tm, tk, e_res):
        g = 2 * tm * tk * 2                        # bf16 G tile, 2 buffers
        o = 2 * tm * dpad * 4                      # f32 output tile
        e = 2 * (np_ if e_res else tk) * dpad * 2  # bf16 RHS
        return g + o + e <= _VMEM_BUDGET

    for e_res in (True, False):                    # resident E kills the re-read
        for tm in row_pref:
            for tk in col_tiles:
                if fits(tm, tk, e_res):
                    return tm, tk, e_res
    return row_tiles[-1], col_tiles[-1], False


def propagate(g_bf16, e_f32):
    """Tiled dense G @ E.  G is bf16, E is cast to bf16, output is f32."""
    n, k = g_bf16.shape
    dpad = e_f32.shape[1]                          # lane-dense (multiple of 128)
    tm, tk, e_res = _choose_tiles(n, dpad)
    nk = k // tk
    e_bf16 = e_f32.astype(jnp.bfloat16)

    if e_res:
        # Constant block index -> E DMA'd into VMEM once for the whole kernel.
        e_spec = pl.BlockSpec((k, dpad), lambda i, kk: (0, 0))
    else:
        e_spec = pl.BlockSpec((tk, dpad), lambda i, kk: (kk, 0))

    kernel = partial(_propagate_kernel, tk=tk, slice_e=(e_res and nk > 1))
    return pl.pallas_call(
        kernel,
        out_shape=jax.ShapeDtypeStruct((n, dpad), jnp.float32),
        grid_spec=pltpu.PrefetchScalarGridSpec(
            num_scalar_prefetch=0,
            grid=(n // tm, nk),
            in_specs=[pl.BlockSpec((tm, tk), lambda i, kk: (i, kk)), e_spec],
            out_specs=pl.BlockSpec((tm, dpad), lambda i, kk: (i, 0))),
        compiler_params=pltpu.CompilerParams(
            dimension_semantics=("parallel", "arbitrary"),
            vmem_limit_bytes=_VMEM_LIMIT),
    )(g_bf16, e_bf16)


# ----------------------------------------------------------------------------
# Kernel 2: fused InfoNCE (F.normalize + cal_loss) for TWO e2 stacks sharing
#           the same e1 stack.  Grid over (layer, negative-tile); e1 is
#           normalized once per layer into VMEM scratch and streamed against
#           both e2 stacks (one launch replaces two cse_loss passes).
# ----------------------------------------------------------------------------
def _infonce2_kernel(e1_ref, e2a_ref, e2b_ref, oa_ref, ob_ref,
                     e1n_ref, posa_ref, posb_ref, nega_ref, negb_ref, *,
                     inv_t, inv_b, nb, tb):
    l = pl.program_id(0)
    kb = pl.program_id(1)

    @pl.when(jnp.logical_and(l == 0, kb == 0))
    def _():
        oa_ref[...] = jnp.zeros_like(oa_ref)
        ob_ref[...] = jnp.zeros_like(ob_ref)

    # New layer: normalize e1 once into scratch, reset negative accumulators.
    @pl.when(kb == 0)
    def _():
        e1 = e1_ref[0]                                            # (B, d)
        n1 = jnp.sqrt(jnp.sum(e1 * e1, axis=1, keepdims=True))
        e1n_ref[...] = e1 / jnp.maximum(n1, 1e-12)
        nega_ref[...] = jnp.zeros_like(nega_ref)
        negb_ref[...] = jnp.zeros_like(negb_ref)

    e1n = e1n_ref[...]

    def stream(e2_ref, pos_ref, neg_ref):
        e2 = e2_ref[0]                                            # (tb, d)
        n2 = jnp.sqrt(jnp.sum(e2 * e2, axis=1, keepdims=True))
        e2n = e2 / jnp.maximum(n2, 1e-12)
        # Positive pairs whose rows live in this negative tile.
        if nb == 1:
            pos_ref[...] = jnp.exp(
                jnp.sum(e1n * e2n, axis=1, keepdims=True) * inv_t)
        else:
            start = pl.multiple_of(kb * tb, tb)
            e1_rows = e1n_ref[pl.ds(start, tb), :]
            pos_ref[pl.ds(start, tb), :] = jnp.exp(
                jnp.sum(e1_rows * e2n, axis=1, keepdims=True) * inv_t)
        # Streamed negatives: sum_j exp(<e1n_i, e2n_j> / t) over this tile.
        # (No max-subtraction: inputs are L2-normalized so |logit|/t <= 1/t.)
        logits = jax.lax.dot_general(e1n, e2n, (((1,), (1,)), ((), ())),
                                     preferred_element_type=jnp.float32)
        neg_ref[...] += jnp.sum(jnp.exp(logits * inv_t), axis=1, keepdims=True)

    stream(e2a_ref, posa_ref, nega_ref)
    stream(e2b_ref, posb_ref, negb_ref)

    @pl.when(kb == pl.num_programs(1) - 1)
    def _():
        # Exact divide (no approx reciprocal); formula matches the reference.
        la = -jnp.log(posa_ref[...] / (nega_ref[...] + 1e-8) + 1e-8)
        lb = -jnp.log(posb_ref[...] / (negb_ref[...] + 1e-8) + 1e-8)
        oa_ref[...] += jnp.sum(la, keepdims=True) * inv_b
        ob_ref[...] += jnp.sum(lb, keepdims=True) * inv_b


def infonce_pair_stacked(e1, e2a, e2b, temp):
    """e1, e2a, e2b: (L, B, d).  Returns (sum_l InfoNCE(e1,e2a),
    sum_l InfoNCE(e1,e2b)) with e1 read and normalized only once."""
    L, B, d = e1.shape
    tb = B
    for t in (512, 256, 128):
        if B > t and B % t == 0:
            tb = t
            break
    nb = B // tb
    kernel = partial(_infonce2_kernel, inv_t=1.0 / float(temp),
                     inv_b=1.0 / B, nb=nb, tb=tb)
    oa, ob = pl.pallas_call(
        kernel,
        out_shape=(jax.ShapeDtypeStruct((1, 1), jnp.float32),
                   jax.ShapeDtypeStruct((1, 1), jnp.float32)),
        grid_spec=pltpu.PrefetchScalarGridSpec(
            num_scalar_prefetch=0,
            grid=(L, nb),
            in_specs=[pl.BlockSpec((1, B, d), lambda l, kb: (l, 0, 0)),
                      pl.BlockSpec((1, tb, d), lambda l, kb: (l, kb, 0)),
                      pl.BlockSpec((1, tb, d), lambda l, kb: (l, kb, 0))],
            out_specs=(pl.BlockSpec((1, 1), lambda l, kb: (0, 0)),
                       pl.BlockSpec((1, 1), lambda l, kb: (0, 0))),
            scratch_shapes=[pltpu.VMEM((B, d), jnp.float32),
                            pltpu.VMEM((B, 1), jnp.float32),
                            pltpu.VMEM((B, 1), jnp.float32),
                            pltpu.VMEM((B, 1), jnp.float32),
                            pltpu.VMEM((B, 1), jnp.float32)]),
        compiler_params=pltpu.CompilerParams(
            dimension_semantics=("arbitrary", "arbitrary")),
    )(e1, e2a, e2b)
    return oa[0, 0], ob[0, 0]


# ----------------------------------------------------------------------------
# Kernel 3: fused BPR loss + embedding L2 regularizer (one launch, two scalars)
# ----------------------------------------------------------------------------
def _bpr_emb_kernel(u_ref, p_ref, n_ref, up_ref, pp_ref, npre_ref,
                    bpr_ref, reg_ref, *, emb_reg, inv_b):
    u = u_ref[...]
    pos = jnp.sum(u * p_ref[...], axis=1, keepdims=True)
    neg = jnp.sum(u * n_ref[...], axis=1, keepdims=True)
    x = neg - pos
    softplus = jnp.maximum(x, 0.0) + jnp.log(1.0 + jnp.exp(-jnp.abs(x)))
    bpr_ref[...] = jnp.sum(softplus, keepdims=True) * inv_b

    ss = (jnp.sum(up_ref[...] * up_ref[...], keepdims=True)
          + jnp.sum(pp_ref[...] * pp_ref[...], keepdims=True)
          + jnp.sum(npre_ref[...] * npre_ref[...], keepdims=True))
    reg_ref[...] = emb_reg * ss


def bpr_and_emb_loss(u, p, n, u_pre, p_pre, n_pre, emb_reg):
    b = u.shape[0]
    kernel = partial(_bpr_emb_kernel, emb_reg=float(emb_reg), inv_b=1.0 / b)
    bpr, reg = pl.pallas_call(
        kernel,
        out_shape=(jax.ShapeDtypeStruct((1, 1), jnp.float32),
                   jax.ShapeDtypeStruct((1, 1), jnp.float32)),
        in_specs=[pl.BlockSpec(memory_space=VMEM)] * 6,
        out_specs=(pl.BlockSpec(memory_space=VMEM),
                   pl.BlockSpec(memory_space=VMEM)),
    )(u, p, n, u_pre, p_pre, n_pre)
    return bpr[0, 0], reg[0, 0]


# --------------------------- glue helpers ------------------------------------
def _dropout(key, x, p):
    if p == 0.0:
        return x
    keep = jax.random.bernoulli(key, 1.0 - p, x.shape)
    return jnp.where(keep, x / (1.0 - p), jnp.zeros_like(x))


def _xavier_normal(key, shape):
    fan_out, fan_in = shape
    std = math.sqrt(2.0 / (fan_in + fan_out))
    return (std * jax.random.normal(key, shape)).astype(jnp.float32)


# --------------------------- model --------------------------------------------
class HMCFPallas:
    def __init__(self, n_users, n_items, adj_dense, *, emb_dim=32, n_layers=2,
                 temp=0.2, emb_reg=2.5e-5, ssl_reg=1e-4, key=None):
        self.n_users = n_users
        self.n_items = n_items
        self.emb_dim = emb_dim
        self.n_layers = n_layers
        self.temp = temp
        self.emb_reg = emb_reg
        self.ssl_reg = ssl_reg

        key = jax.random.PRNGKey(0) if key is None else key
        k1, k2, k3, k4, k5 = jax.random.split(key, 5)
        self.user_embedding = _xavier_normal(k1, (n_users, emb_dim))
        self.item_embedding = _xavier_normal(k2, (n_items, emb_dim))
        self.suser_embedding = _xavier_normal(k3, (n_users, emb_dim))
        self.sitem_embedding = _xavier_normal(k4, (n_items, emb_dim))
        self._drop_key = k5

        # G = D^-1/2 A D^-1/2 (dense equivalent of _cal_sparse_adj), guarded
        # against isolated nodes, padded for clean (8,128) tiling, stored bf16.
        N = n_users + n_items
        deg = adj_dense.sum(axis=1)
        with np.errstate(divide="ignore"):
            d_inv = np.power(deg, -0.5)
        d_inv[~np.isfinite(d_inv)] = 0.0
        g = (d_inv[:, None] * adj_dense) * d_inv[None, :]

        Np = ((N + 255) // 256) * 256
        g_pad = np.zeros((Np, Np), dtype=np.float32)
        g_pad[:N, :N] = g
        self.G = jnp.asarray(g_pad, dtype=jnp.bfloat16)
        self._N = N
        self._Np = Np
        self._dpad = ((3 * emb_dim + 127) // 128) * 128   # fused lane-dense RHS

    # -------------------------------------------------------------------------
    def inference1(self):
        nl = self.n_layers
        d = self.emb_dim
        N, Np, dpad = self._N, self._Np, self._dpad
        self.zu = [None] * nl; self.zuu = [None] * nl
        self.zi = [None] * nl; self.zii = [None] * nl
        self.hu = [None] * nl; self.hi = [None] * nl

        all_emb = [jnp.concatenate([self.user_embedding, self.item_embedding], axis=0)]
        sall_emb = [jnp.concatenate([self.suser_embedding, self.sitem_embedding], axis=0)]

        key = self._drop_key
        for i in range(nl):
            key, kd1, kd2 = jax.random.split(key, 3)
            zqg1 = all_emb[i]                              # dropout p=0 -> identity
            zqg2 = _dropout(kd1, all_emb[i], 0.5)
            szq = _dropout(kd2, sall_emb[i], 0.5)

            # Fuse the three per-layer propagations: read G once, lane-dense RHS.
            fused = jnp.concatenate([zqg1, zqg2, szq], axis=1)          # (N, 3d)
            fused = jnp.pad(fused, ((0, Np - N), (0, dpad - 3 * d)))
            out = propagate(self.G, fused)[:N]                          # (N, dpad)

            gnn_emb1 = out[:, :d]
            gnn_emb2 = out[:, d:2 * d]
            g_hyper = out[:, 2 * d:3 * d]

            self.zu[i], self.zi[i] = gnn_emb1[:self.n_users], gnn_emb1[self.n_users:]
            self.zuu[i], self.zii[i] = gnn_emb2[:self.n_users], gnn_emb2[self.n_users:]
            self.hu[i], self.hi[i] = g_hyper[:self.n_users], g_hyper[self.n_users:]

            all_emb.append(gnn_emb1 + all_emb[i])
            sall_emb.append(g_hyper + sall_emb[i])

        total = all_emb[0]
        for e in all_emb[1:]:
            total = total + e
        self.ua_embedding = total[:self.n_users]
        self.ia_embedding = total[self.n_users:]

    # -------------------------------------------------------------------------
    def cse_losses(self, users, positems, t):
        """Returns the raw (un-scaled) pair (cse_loss_s, cse_loss_h) with the
        shared e1 stacks (zu/zi) read and normalized only once."""
        # torch.unique equivalent; kept on host (indices arrive as host arrays).
        users = np.unique(np.asarray(users))
        items = np.unique(np.asarray(positems))
        nl = self.n_layers
        u1 = jnp.stack([self.zu[i][users] for i in range(nl)], axis=0)
        u2s = jnp.stack([self.zuu[i][users] for i in range(nl)], axis=0)
        u2h = jnp.stack([self.hu[i][users] for i in range(nl)], axis=0)
        i1 = jnp.stack([self.zi[i][items] for i in range(nl)], axis=0)
        i2s = jnp.stack([self.zii[i][items] for i in range(nl)], axis=0)
        i2h = jnp.stack([self.hi[i][items] for i in range(nl)], axis=0)

        lu_s, lu_h = infonce_pair_stacked(u1, u2s, u2h, t)
        li_s, li_h = infonce_pair_stacked(i1, i2s, i2h, t)
        return lu_s + li_s, lu_h + li_h

    # -------------------------------------------------------------------------
    def forward(self, users, pos_items, neg_items):
        users = np.asarray(users, dtype=np.int32)
        pos_items = np.asarray(pos_items, dtype=np.int32)
        neg_items = np.asarray(neg_items, dtype=np.int32)

        self.inference1()

        u_emb = self.ua_embedding[users]
        pos_emb = self.ia_embedding[pos_items]
        neg_emb = self.ia_embedding[neg_items]
        u_pre = self.user_embedding[users]
        pos_pre = self.item_embedding[pos_items]
        neg_pre = self.item_embedding[neg_items]

        mf_loss, e_loss = bpr_and_emb_loss(u_emb, pos_emb, neg_emb,
                                           u_pre, pos_pre, neg_pre, self.emb_reg)

        s_raw, h_raw = self.cse_losses(users, pos_items, self.temp)
        loss_s = self.ssl_reg * s_raw
        loss_h = self.ssl_reg * h_raw

        return mf_loss, loss_h, loss_s, e_loss


# --------------------------- main ---------------------------------------------
if __name__ == "__main__":
    n_users, n_items = 24, 40
    emb_dim, n_layers, batch = 32, 2, 8
    N = n_users + n_items

    # deterministic synthetic bipartite interaction graph (every node has >=1 edge)
    A = np.zeros((N, N), dtype=np.float32)
    for u in range(n_users):
        for j in (u % n_items, (3 * u + 7) % n_items):
            A[u, n_users + j] = 1.0
            A[n_users + j, u] = 1.0
    for j in range(n_items):
        u = j % n_users
        A[u, n_users + j] = 1.0
        A[n_users + j, u] = 1.0

    master = jax.random.PRNGKey(0)
    k_model, k_u, k_p, k_n = jax.random.split(master, 4)

    model = HMCFPallas(n_users, n_items, A,
                       emb_dim=emb_dim, n_layers=n_layers,
                       temp=0.2, emb_reg=2.5e-5, ssl_reg=1e-4, key=k_model)

    users = np.asarray(jax.random.randint(k_u, (batch,), 0, n_users))
    pos_items = np.asarray(jax.random.randint(k_p, (batch,), 0, n_items))
    neg_items = np.asarray(jax.random.randint(k_n, (batch,), 0, n_items))

    mf_loss, loss_h, loss_s, e_loss = model.forward(users, pos_items, neg_items)
    (mf_loss, loss_h, loss_s, e_loss) = jax.block_until_ready(
        (mf_loss, loss_h, loss_s, e_loss))

    for v in (mf_loss, loss_h, loss_s, e_loss):
        assert np.isfinite(float(v)), "non-finite loss"

    print("KERNEL_OK")
</pallas_src>

<mosaic_0001>
module attributes {stable_mosaic.version = 11 : i64} {
  func.func @_propagate_kernel(%arg0: i32, %arg1: i32, %arg2: memref<128x256xbf16, #tpu.memory_space<vmem>>, %arg3: memref<256x128xbf16, #tpu.memory_space<vmem>>, %arg4: memref<128x128xf32, #tpu.memory_space<vmem>>) attributes {dimension_semantics = [#tpu.dimension_semantics<parallel>, #tpu.dimension_semantics<arbitrary>], iteration_bounds = array<i64: 2, 1>, scalar_prefetch = 0 : i64, scratch_operands = 0 : i64, tpu.core_type = #tpu.core_type<tc>, window_params = [{transform_indices = @transform_0, window_bounds = array<i64: 128, 256>}, {pipeline_mode = #tpu.pipeline_mode<synchronous>, transform_indices = @transform_1, window_bounds = array<i64: 256, 128>}, {transform_indices = @transform_2, window_bounds = array<i64: 128, 128>}]} {
    %c0 = arith.constant 0 : index
    %c0_0 = arith.constant 0 : index
    %0 = vector.load %arg3[%c0, %c0_0] : memref<256x128xbf16, #tpu.memory_space<vmem>>, vector<256x128xbf16>
    %c0_1 = arith.constant 0 : index
    %c0_2 = arith.constant 0 : index
    %1 = vector.load %arg2[%c0_1, %c0_2] : memref<128x256xbf16, #tpu.memory_space<vmem>>, vector<128x256xbf16>
    %cst = arith.constant dense<0.000000e+00> : vector<128x128xf32>
    %2 = tpu.matmul %1, %0, %cst {dimension_numbers = #tpu.dot_dimension_numbers<[1], [0], [0], [1], [0, 0, 1, 1], [], []>} : vector<128x256xbf16>, vector<256x128xbf16>, vector<128x128xf32> -> vector<128x128xf32>
    %c0_i32 = arith.constant 0 : i32
    %3 = arith.cmpi eq, %arg1, %c0_i32 : i32
    %4 = arith.extui %3 : i1 to i32
    %c0_i32_3 = arith.constant 0 : i32
    %5 = arith.cmpi ne, %4, %c0_i32_3 : i32
    scf.if %5 {
      %c0_6 = arith.constant 0 : index
      %c0_7 = arith.constant 0 : index
      %9 = vector.load %arg4[%c0_6, %c0_7] : memref<128x128xf32, #tpu.memory_space<vmem>>, vector<128x128xf32>
      tpu.vector_store %arg4[%c0_6, %c0_7], %2 {strides = array<i32>} : memref<128x128xf32, #tpu.memory_space<vmem>>, vector<128x128xf32>,
    } else {
    }
    %c0_i32_4 = arith.constant 0 : i32
    %6 = arith.cmpi ne, %arg1, %c0_i32_4 : i32
    %7 = arith.extui %6 : i1 to i32
    %c0_i32_5 = arith.constant 0 : i32
    %8 = arith.cmpi ne, %7, %c0_i32_5 : i32
    scf.if %8 {
      %c0_6 = arith.constant 0 : index
      %c0_7 = arith.constant 0 : index
      %9 = vector.load %arg4[%c0_6, %c0_7] : memref<128x128xf32, #tpu.memory_space<vmem>>, vector<128x128xf32>
      %10 = arith.addf %9, %2 : vector<128x128xf32>
      %c0_8 = arith.constant 0 : index
      %c0_9 = arith.constant 0 : index
      %11 = vector.load %arg4[%c0_8, %c0_9] : memref<128x128xf32, #tpu.memory_space<vmem>>, vector<128x128xf32>
      tpu.vector_store %arg4[%c0_8, %c0_9], %10 {strides = array<i32>} : memref<128x128xf32, #tpu.memory_space<vmem>>, vector<128x128xf32>,
    } else {
    }
    return
  }
  func.func @transform_0(%arg0: i32, %arg1: i32) -> (i32, i32) {
    %c0_i32 = arith.constant 0 : i32
    return %arg0, %arg1 : i32, i32
  }
  func.func @transform_1(%arg0: i32, %arg1: i32) -> (i32, i32) {
    %c0_i32 = arith.constant 0 : i32
    %c0_i32_0 = arith.constant 0 : i32
    %c0_i32_1 = arith.constant 0 : i32
    return %c0_i32, %c0_i32_0 : i32, i32
  }
  func.func @transform_2(%arg0: i32, %arg1: i32) -> (i32, i32) {
    %c0_i32 = arith.constant 0 : i32
    %c0_i32_0 = arith.constant 0 : i32
    return %arg0, %c0_i32 : i32, i32
  }
}

</mosaic_0001>

<llo_original>
// kernel: tpu_custom_call.1
$region0: #{tpu_custom_call.1}
  #allocation0 [shape = 'u32[]', space=smem, size = 0x4, offset = 0x4, fixed_abs, tag = 'smem constant byte address 0x4 - core index']
  #allocation1 [shape = 'u32[144,128]{1,0:T(1,128)}', space=vmem, size = 0x12000, scoped, tag = 'internal scratch']
  %s0 = inlined_call_operand.hbm [shape: bf16[256,256], index: 0, kind: input, shape index: {}]
  %s1 = inlined_call_operand.hbm [shape: bf16[256,128], index: 1, kind: input, shape index: {}]
  %s2 = inlined_call_operand.hbm [shape: f32[256,128], index: 2, kind: output, shape index: {}]
  %s3 = sld [smem:[#allocation0]]
  $region57: #{tpu_custom_call.1} parent=0
    _
  %s5 = ssub.s32 1, %s3
  %s6 = scalar_select 0, %s5, %s3
  $region1: #{tpu_custom_call.1} parent=0
    #allocation2 [shape = 'u8[131072]{0}', space=vmem, size = 0x20000, scoped, tag = 'input window, operand 0']
    #allocation3 [shape = 's32[2]{0}', space=sflag, size = 0x8, scoped, tag = 'scoped memory for tpu_custom_call.1']
    #allocation4 [shape = 's32[2]{0}', space=sflag, size = 0x8, scoped, tag = 'scoped memory for tpu_custom_call.1']
    #allocation5 [shape = 'u8[65536]{0}', space=vmem, size = 0x10000, scoped, tag = 'input window, operand 1, single buffered']
    #allocation6 [shape = 's32[1]{0}', space=sflag, size = 0x4, scoped, tag = 'scoped memory for tpu_custom_call.1']
    #allocation7 [shape = 'u8[131072]{0}', space=vmem, size = 0x20000, scoped, tag = 'output window, operand 0']
    %7 = vsyncpa [#allocation3], 0
    %s8 = scalar_lea.sflag [#allocation3], 1
    %9 = vsyncpa %s8, 0
    %10 = vsyncpa [#allocation6], 0
    %11 = vsyncpa [#allocation4], 0
    %s12 = scalar_lea.sflag [#allocation4], 1
    %13 = vsyncpa %s12, 0
    loop: start=0, step=1, limit=4
    $region2: #{tpu_custom_call.1} parent=1 // loop_pre_header
      _
    $region3: #{tpu_custom_call.1} parent=1 // loop_header
      %s15 = sphi 0, %s19
      %p16 = scmp.ge.s32.totalorder %s15, 4
      %s22 = sphi 0, %s34
      %s23 = sphi 0, %s30
      %s24 = sphi 0, %s22
      %s25 = sphi 0, %s23
      %s26 = sphi 0, %s24
      %s27 = sphi 0, %s25
      %s39 = sphi 0, %s41
      %s42 = sphi 0, %s39
      %s43 = sphi 0, %s42
      %s59 = sphi 0, %s43
      %s63 = sphi 0, %s63
      %s65 = sphi 0, %s63
      %s66 = sphi 0, %s65
      %s80 = sphi 0, %s66
      %s86 = sphi 0, %s88
      %s89 = sphi 0, %s86
      %s90 = sphi 0, %s89
      %s106 = sphi 0, %s90
    $region4: #{tpu_custom_call.1} parent=1 // loop_header_branch
      %18 = sbr.rel (%p16) target = $region8
    $region5: #{tpu_custom_call.1} parent=1 // loop_body
      %s20 = ssub.s32 %s15, 1
      %s21 = ssub.s32 %s15, 2
      %s28 = sadd.s32 1, %s23
      %p29 = scmp.ge.s32.totalorder %s28, 1
      %s30 = scalar_select %p29, 0, %s28
      %s31 = sadd.s32 1, %s22
      %s32 = scalar_select %p29, %s31, %s22
      %p33 = scmp.ge.s32.totalorder %s32, 2
      %s34 = scalar_select %p33, 0, %s32
      %s35 = ssub.s32 %s22, %s34
      %s36 = ssub.s32 %s23, %s30
      %s37 = sor.u32 %s35, %s36
      %p38 = scmp.eq.s32.totalorder %s37, 0
      %s40 = sadd.s32 %s39, 1
      %s41 = scalar_select %p38, %s39, %s40
      %p44 = pneg %p38
      %p45 = scmp.eq.s32.totalorder %s15, 1
      %p46 = por %p44, %p45
      %p47 = scmp.ne.s32.totalorder %s39, %s42
      %p48 = scmp.eq.s32.totalorder %s15, 0
      %p49 = por %p47, %p48
      %p50 = scmp.ne.s32.totalorder %s39, %s42
      %p51 = scmp.eq.s32.totalorder %s20, 1
      %p52 = por %p50, %p51
      %p53 = scmp.ne.s32.totalorder %s42, %s43
      %p54 = scmp.eq.s32.totalorder %s20, 0
      %p55 = por %p53, %p54
      %p56 = scmp.ne.s32.totalorder %s42, %s43
      %p57 = scmp.eq.s32.totalorder %s21, 1
      %p58 = por %p56, %p57
      %p60 = scmp.ne.s32.totalorder %s43, %s59
      %p61 = scmp.eq.s32.totalorder %s21, 0
      %p62 = por %p60, %p61
      %s64 = sadd.s32 %s63, 1
      %p67 = scmp.eq.s32.totalorder %s15, 1
      %p68 = scmp.ne.s32.totalorder %s63, %s65
      %p69 = scmp.eq.s32.totalorder %s15, 0
      %p70 = por %p68, %p69
      %p71 = scmp.ne.s32.totalorder %s63, %s65
      %p72 = scmp.eq.s32.totalorder %s20, 1
      %p73 = por %p71, %p72
      %p74 = scmp.ne.s32.totalorder %s65, %s66
      %p75 = scmp.eq.s32.totalorder %s20, 0
      %p76 = por %p74, %p75
      %p77 = scmp.ne.s32.totalorder %s65, %s66
      %p78 = scmp.eq.s32.totalorder %s21, 1
      %p79 = por %p77, %p78
      %p81 = scmp.ne.s32.totalorder %s66, %s80
      %p82 = scmp.eq.s32.totalorder %s21, 0
      %p83 = por %p81, %p82
      %s84 = ssub.s32 %s22, %s34
      %p85 = scmp.eq.s32.totalorder %s84, 0
      %s87 = sadd.s32 %s86, 1
      %s88 = scalar_select %p85, %s86, %s87
      %p91 = pneg %p85
      %p92 = scmp.eq.s32.totalorder %s15, 1
      %p93 = por %p91, %p92
      %p94 = scmp.ne.s32.totalorder %s86, %s89
      %p95 = scmp.eq.s32.totalorder %s15, 0
      %p96 = por %p94, %p95
      %p97 = scmp.ne.s32.totalorder %s86, %s89
      %p98 = scmp.eq.s32.totalorder %s20, 1
      %p99 = por %p97, %p98
      %p100 = scmp.ne.s32.totalorder %s89, %s90
      %p101 = scmp.eq.s32.totalorder %s20, 0
      %p102 = por %p100, %p101
      %p103 = scmp.ne.s32.totalorder %s89, %s90
      %p104 = scmp.eq.s32.totalorder %s21, 1
      %p105 = por %p103, %p104
      %p107 = scmp.ne.s32.totalorder %s90, %s106
      %p108 = scmp.eq.s32.totalorder %s21, 0
      %p109 = por %p107, %p108
      %p110 = scmp.le.s32.totalorder 1, %s15
      %p111 = scmp.lt.s32.totalorder %s15, 3
      %p112 = pnand %p110, %p111
      %p113 = pneg %p112
      // Predicated region
      $region9: #{tpu_custom_call.1} parent=5 // pred_check
        _
      $region10: #{tpu_custom_call.1} parent=5 // pred_check_branch
        %115 = sbr.rel (%p112) target = $region12
      $region11: #{tpu_custom_call.1} parent=5 // pred_region
        %s116 = ssub.s32 %s15, 1
        // Predicated region
        $region13: #{tpu_custom_call.1} parent=11 // pred_check
          %p117 = pneg %p76
        $region14: #{tpu_custom_call.1} parent=11 // pred_check_branch
          %119 = sbr.rel (%p117) target = $region16
        $region15: #{tpu_custom_call.1} parent=11 // pred_region
          %s121 = ssub.s32 2048, 2048
          %122 = vsyncadd [#allocation6], %s121
          %s123 = sshll.u32 [#allocation5], 4
          %s124 = int_to_ptr.vmem [resolvable:$true] %s123
          %129 = dma.hbm_to_vmem [thread:$0]  %s1, 2048, %s124, [#allocation6], 64, 64, 4
        $region16: #{tpu_custom_call.1} parent=11 // pred_fallthru
          _
      $region12: #{tpu_custom_call.1} parent=5 // pred_fallthru
        _
      %p130 = scmp.lt.s32.totalorder %s15, 2
      // Predicated region
      $region17: #{tpu_custom_call.1} parent=5 // pred_check
        %p131 = pneg %p130
      $region18: #{tpu_custom_call.1} parent=5 // pred_check_branch
        %133 = sbr.rel (%p131) target = $region20
      $region19: #{tpu_custom_call.1} parent=5 // pred_region
        // Predicated region
        $region21: #{tpu_custom_call.1} parent=19 // pred_check
          %p134 = pneg %p49
        $region22: #{tpu_custom_call.1} parent=19 // pred_check_branch
          %136 = sbr.rel (%p134) target = $region24
        $region23: #{tpu_custom_call.1} parent=19 // pred_region
          %s137 = sand.u32 %s39, 1
          %s138 = scalar_lea.sflag [#allocation3], %s137
          %s139 = sand.u32 %s39, 1
          %s140 = smul.addr %s139, 128
          %s141 = scalar_lea.vmem [#allocation2], %s140
          %s142 = smul.u32 16, %s22
          %s143 = smul.u32 2, %s23
          %s145 = ssub.s32 2048, 2048
          %146 = vsyncadd %s138, %s145
          %s147 = smul.addr %s142, 2
          %s148 = sadd.s32 %s143, %s147
          %s149 = smul.addr %s148, 64
          %s150 = scalar_lea.hbm %s0, %s149
          %s151 = sshll.u32 %s141, 4
          %s152 = int_to_ptr.vmem [resolvable:$true] %s151
          %157 = dma.hbm_to_vmem [thread:$0]  %s150, 2048, %s152, %s138, 128, 128, 8
        $region24: #{tpu_custom_call.1} parent=19 // pred_fallthru
          _
      $region20: #{tpu_custom_call.1} parent=5 // pred_fallthru
        _
      %p158 = scmp.le.s32.totalorder 1, %s15
      %p159 = scmp.lt.s32.totalorder %s15, 3
      %p160 = pnand %p158, %p159
      %p161 = pneg %p160
      // Predicated region
      $region25: #{tpu_custom_call.1} parent=5 // pred_check
        _
      $region26: #{tpu_custom_call.1} parent=5 // pred_check_branch
        %163 = sbr.rel (%p160) target = $region28
      $region27: #{tpu_custom_call.1} parent=5 // pred_region
        %s164 = ssub.s32 %s15, 1
        %s165 = sand.u32 %s42, 1
        %s166 = scalar_lea.sflag [#allocation3], %s165
        %s167 = sand.u32 %s42, 1
        %s168 = smul.addr %s167, 128
        %s169 = scalar_lea.vmem [#allocation2], %s168
        // Predicated region
        $region29: #{tpu_custom_call.1} parent=27 // pred_check
          %p170 = pneg %p55
        $region30: #{tpu_custom_call.1} parent=27 // pred_check_branch
          %172 = sbr.rel (%p170) target = $region32
        $region31: #{tpu_custom_call.1} parent=27 // pred_region
          %173 = dma.done %s166, 2048
        $region32: #{tpu_custom_call.1} parent=27 // pred_fallthru
          _
        // Predicated region
        $region33: #{tpu_custom_call.1} parent=27 // pred_check
          %p174 = pneg %p76
        $region34: #{tpu_custom_call.1} parent=27 // pred_check_branch
          %176 = sbr.rel (%p174) target = $region36
        $region35: #{tpu_custom_call.1} parent=27 // pred_region
          %177 = dma.done [#allocation6], 2048
        $region36: #{tpu_custom_call.1} parent=27 // pred_fallthru
          _
        %s178 = sand.u32 %s42, 1
        %s179 = scalar_lea.sflag [#allocation3], %s178
        %s180 = sand.u32 %s42, 1
        %s181 = smul.addr %s180, 128
        %s182 = scalar_lea.vmem [#allocation2], %s181
        %p183 = pneg %p55
        %p184 = pneg %p52
        %p185 = pneg %p76
        %p186 = pneg %p73
        %p187 = pneg %p102
        %p188 = pneg %p99
        %s189 = sand.u32 %s89, 1
        %s190 = scalar_lea.sflag [#allocation4], %s189
        %s191 = sand.u32 %s89, 1
        %s192 = smul.addr %s191, 128
        %s193 = scalar_lea.vmem [#allocation7], %s192
        %s194 = smul.u32 16, %s24
        %s195 = smul.u32 2, %s25
        %s196 = smul.u32 16, %s24
        %v198 = vld [vmem:[#allocation5] sm:$0xf]
        %v199 = vld [vmem:[#allocation5 + $0x4] sm:$0xf]
        %v200 = vld [vmem:[#allocation5 + $0x8] sm:$0xf]
        %v201 = vld [vmem:[#allocation5 + $0xc] sm:$0xf]
        %v202 = vld [vmem:[#allocation5 + $0x10] sm:$0xf]
        %v203 = vld [vmem:[#allocation5 + $0x14] sm:$0xf]
        %v204 = vld [vmem:[#allocation5 + $0x18] sm:$0xf]
        %v205 = vld [vmem:[#allocation5 + $0x1c] sm:$0xf]
        %v206 = vld [vmem:[#allocation5 + $0x20] sm:$0xf]
        %v207 = vld [vmem:[#allocation5 + $0x24] sm:$0xf]
        %v208 = vld [vmem:[#allocation5 + $0x28] sm:$0xf]
        %v209 = vld [vmem:[#allocation5 + $0x2c] sm:$0xf]
        %v210 = vld [vmem:[#allocation5 + $0x30] sm:$0xf]
        %v211 = vld [vmem:[#allocation5 + $0x34] sm:$0xf]
        %v212 = vld [vmem:[#allocation5 + $0x38] sm:$0xf]
        %v213 = vld [vmem:[#allocation5 + $0x3c] sm:$0xf]
        %v214 = vld [vmem:[#allocation5 + $0x40] sm:$0xf]
        %v215 = vld [vmem:[#allocation5 + $0x44] sm:$0xf]
        %v216 = vld [vmem:[#allocation5 + $0x48] sm:$0xf]
        %v217 = vld [vmem:[#allocation5 + $0x4c] sm:$0xf]
        %v218 = vld [vmem:[#allocation5 + $0x50] sm:$0xf]
        %v219 = vld [vmem:[#allocation5 + $0x54] sm:$0xf]
        %v220 = vld [vmem:[#allocation5 + $0x58] sm:$0xf]
        %v221 = vld [vmem:[#allocation5 + $0x5c] sm:$0xf]
        %v222 = vld [vmem:[#allocation5 + $0x60] sm:$0xf]
        %v223 = vld [vmem:[#allocation5 + $0x64] sm:$0xf]
        %v224 = vld [vmem:[#allocation5 + $0x68] sm:$0xf]
        %v225 = vld [vmem:[#allocation5 + $0x6c] sm:$0xf]
        %v226 = vld [vmem:[#allocation5 + $0x70] sm:$0xf]
        %v227 = vld [vmem:[#allocation5 + $0x74] sm:$0xf]
        %v228 = vld [vmem:[#allocation5 + $0x78] sm:$0xf]
        %v229 = vld [vmem:[#allocation5 + $0x7c] sm:$0xf]
        %v230 = vld [vmem:[%s169] sm:$0xff]
        %v231 = vld [vmem:[%s169 + $0x8] sm:$0xff]
        %v232 = vld [vmem:[%s169 + $0x10] sm:$0xff]
        %v233 = vld [vmem:[%s169 + $0x18] sm:$0xff]
        %v234 = vld [vmem:[%s169 + $0x20] sm:$0xff]
        %v235 = vld [vmem:[%s169 + $0x28] sm:$0xff]
        %v236 = vld [vmem:[%s169 + $0x30] sm:$0xff]
        %v237 = vld [vmem:[%s169 + $0x38] sm:$0xff]
        %v238 = vld [vmem:[%s169 + $0x40] sm:$0xff]
        %v239 = vld [vmem:[%s169 + $0x48] sm:$0xff]
        %v240 = vld [vmem:[%s169 + $0x50] sm:$0xff]
        %v241 = vld [vmem:[%s169 + $0x58] sm:$0xff]
        %v242 = vld [vmem:[%s169 + $0x60] sm:$0xff]
        %v243 = vld [vmem:[%s169 + $0x68] sm:$0xff]
        %v244 = vld [vmem:[%s169 + $0x70] sm:$0xff]
        %v245 = vld [vmem:[%s169 + $0x78] sm:$0xff]
        %v262 = vunpack.c.l.b16 %v230
        %v263 = vunpack.c.h.b16 %v230
        %v264 = vunpack.c.l.b16 %v231
        %v265 = vunpack.c.h.b16 %v231
        %v266 = vunpack.c.l.b16 %v232
        %v267 = vunpack.c.h.b16 %v232
        %v268 = vunpack.c.l.b16 %v233
        %v269 = vunpack.c.h.b16 %v233
        %v270 = vunpack.c.l.b16 %v234
        %v271 = vunpack.c.h.b16 %v234
        %v272 = vunpack.c.l.b16 %v235
        %v273 = vunpack.c.h.b16 %v235
        %v274 = vunpack.c.l.b16 %v236
        %v275 = vunpack.c.h.b16 %v236
        %v276 = vunpack.c.l.b16 %v237
        %v277 = vunpack.c.h.b16 %v237
        %v278 = vunpack.c.l.b16 %v238
        %v279 = vunpack.c.h.b16 %v238
        %v280 = vunpack.c.l.b16 %v239
        %v281 = vunpack.c.h.b16 %v239
        %v282 = vunpack.c.l.b16 %v240
        %v283 = vunpack.c.h.b16 %v240
        %v284 = vunpack.c.l.b16 %v241
        %v285 = vunpack.c.h.b16 %v241
        %v286 = vunpack.c.l.b16 %v242
        %v287 = vunpack.c.h.b16 %v242
        %v288 = vunpack.c.l.b16 %v243
        %v289 = vunpack.c.h.b16 %v243
        %v290 = vunpack.c.l.b16 %v244
        %v291 = vunpack.c.h.b16 %v244
        %v292 = vunpack.c.l.b16 %v245
        %v293 = vunpack.c.h.b16 %v245
        %v294 = vpack.c.b16 %v264, %v262
        %v295 = vpack.c.b16 %v265, %v263
        %v296 = vpack.c.b16 %v268, %v266
        %v297 = vpack.c.b16 %v269, %v267
        %v298 = vpack.c.b16 %v272, %v270
        %v299 = vpack.c.b16 %v273, %v271
        %v300 = vpack.c.b16 %v276, %v274
        %v301 = vpack.c.b16 %v277, %v275
        %v302 = vpack.c.b16 %v280, %v278
        %v303 = vpack.c.b16 %v281, %v279
        %v304 = vpack.c.b16 %v284, %v282
        %v305 = vpack.c.b16 %v285, %v283
        %v306 = vpack.c.b16 %v288, %v286
        %v307 = vpack.c.b16 %v289, %v287
        %v308 = vpack.c.b16 %v292, %v290
        %v309 = vpack.c.b16 %v293, %v291
        %v358 = vunpack.c.l.b16 %v198
        %v359 = vunpack.c.l.b16 %v199
        %v360 = vunpack.c.l.b16 %v200
        %v361 = vunpack.c.l.b16 %v201
        %v362 = vunpack.c.l.b16 %v202
        %v363 = vunpack.c.l.b16 %v203
        %v364 = vunpack.c.l.b16 %v204
        %v365 = vunpack.c.l.b16 %v205
        %v366 = vunpack.c.l.b16 %v206
        %v367 = vunpack.c.l.b16 %v207
        %v368 = vunpack.c.l.b16 %v208
        %v369 = vunpack.c.l.b16 %v209
        %v370 = vunpack.c.l.b16 %v210
        %v371 = vunpack.c.l.b16 %v211
        %v372 = vunpack.c.l.b16 %v212
        %v373 = vunpack.c.l.b16 %v213
        %v374 = vunpack.c.l.b16 %v214
        %v375 = vunpack.c.l.b16 %v215
        %v376 = vunpack.c.l.b16 %v216
        %v377 = vunpack.c.l.b16 %v217
        %v378 = vunpack.c.l.b16 %v218
        %v379 = vunpack.c.l.b16 %v219
        %v380 = vunpack.c.l.b16 %v220
        %v381 = vunpack.c.l.b16 %v221
        %v382 = vunpack.c.l.b16 %v222
        %v383 = vunpack.c.l.b16 %v223
        %v384 = vunpack.c.l.b16 %v224
        %v385 = vunpack.c.l.b16 %v225
        %v386 = vunpack.c.l.b16 %v226
        %v387 = vunpack.c.l.b16 %v227
        %v388 = vunpack.c.l.b16 %v228
        %v389 = vunpack.c.l.b16 %v229
        %v390 = vpack.c.b16 %v359, %v358
        %v391 = vpack.c.b16 %v361, %v360
        %v392 = vpack.c.b16 %v363, %v362
        %v393 = vpack.c.b16 %v365, %v364
        %v394 = vpack.c.b16 %v367, %v366
        %v395 = vpack.c.b16 %v369, %v368
        %v396 = vpack.c.b16 %v371, %v370
        %v397 = vpack.c.b16 %v373, %v372
        %v398 = vpack.c.b16 %v375, %v374
        %v399 = vpack.c.b16 %v377, %v376
        %v400 = vpack.c.b16 %v379, %v378
        %v401 = vpack.c.b16 %v381, %v380
        %v402 = vpack.c.b16 %v383, %v382
        %v403 = vpack.c.b16 %v385, %v384
        %v404 = vpack.c.b16 %v387, %v386
        %v405 = vpack.c.b16 %v389, %v388
        %422 = vmatprep.subr.bf16.mxu0 0
        %423 = vmatpush1.bf16.msra.mxu0 %v390
        %424 = vmatprep.subr.bf16.mxu0 0
        %425 = vmatpush1.bf16.msra.mxu0 %v391
        %426 = vmatprep.subr.bf16.mxu0 0
        %427 = vmatpush1.bf16.msra.mxu0 %v392
        %428 = vmatprep.subr.bf16.mxu0 0
        %429 = vmatpush1.bf16.msra.mxu0 %v393
        %430 = vmatprep.subr.bf16.mxu0 0
        %431 = vmatpush1.bf16.msra.mxu0 %v394
        %432 = vmatprep.subr.bf16.mxu0 0
        %433 = vmatpush1.bf16.msra.mxu0 %v395
        %434 = vmatprep.subr.bf16.mxu0 0
        %435 = vmatpush1.bf16.msra.mxu0 %v396
        %436 = vmatprep.subr.bf16.mxu0 0
        %437 = vmatpush1.bf16.msra.mxu0 %v397
        %438 = vmatprep.subr.bf16.mxu0 0
        %439 = vmatpush1.bf16.msra.mxu0 %v398
        %440 = vmatprep.subr.bf16.mxu0 0
        %441 = vmatpush1.bf16.msra.mxu0 %v399
        %442 = vmatprep.subr.bf16.mxu0 0
        %443 = vmatpush1.bf16.msra.mxu0 %v400
        %444 = vmatprep.subr.bf16.mxu0 0
        %445 = vmatpush1.bf16.msra.mxu0 %v401
        %446 = vmatprep.subr.bf16.mxu0 0
        %447 = vmatpush1.bf16.msra.mxu0 %v402
        %448 = vmatprep.subr.bf16.mxu0 0
        %449 = vmatpush1.bf16.msra.mxu0 %v403
        %450 = vmatprep.subr.bf16.mxu0 0
        %451 = vmatpush1.bf16.msra.mxu0 %v404
        %452 = vmatprep.subr.bf16.mxu0 0
        %453 = vmatpush1.bf16.msra.mxu0 %v405
        %454 = vmatprep.mubr.bf16.mxu0 %v295
        %455 = vmatmul.mubr.bf16.gmra.mrb[0].mxu0 %v294
        %v456 = vpop.f32.mrb[0].mxu0
        %v457 = vadd.f32 0.0, %v456
        %v458 = vpop.f32.mrb[0].mxu0
        %v459 = vpop.f32.mrb[0].mxu0
        %v460 = vadd.f32 0.0, %v459
        %v461 = vpop.f32.mrb[0].mxu0
        %462 = vmatprep.mubr.bf16.mxu0 %v297
        %463 = vmatmul.mubr.bf16.gmra.mrb[0].mxu0 %v296
        %v464 = vpop.f32.mrb[0].mxu0
        %v465 = vadd.f32 0.0, %v464
        %v466 = vpop.f32.mrb[0].mxu0
        %v467 = vpop.f32.mrb[0].mxu0
        %v468 = vadd.f32 0.0, %v467
        %v469 = vpop.f32.mrb[0].mxu0
        %470 = vmatprep.mubr.bf16.mxu0 %v299
        %471 = vmatmul.mubr.bf16.gmra.mrb[0].mxu0 %v298
        %v472 = vpop.f32.mrb[0].mxu0
        %v473 = vadd.f32 0.0, %v472
        %v474 = vpop.f32.mrb[0].mxu0
        %v475 = vpop.f32.mrb[0].mxu0
        %v476 = vadd.f32 0.0, %v475
        %v477 = vpop.f32.mrb[0].mxu0
        %478 = vmatprep.mubr.bf16.mxu0 %v301
        %479 = vmatmul.mubr.bf16.gmra.mrb[0].mxu0 %v300
        %v480 = vpop.f32.mrb[0].mxu0
        %v481 = vadd.f32 0.0, %v480
        %v482 = vpop.f32.mrb[0].mxu0
        %v483 = vpop.f32.mrb[0].mxu0
        %v484 = vadd.f32 0.0, %v483
        %v485 = vpop.f32.mrb[0].mxu0
        %486 = vmatprep.mubr.bf16.mxu0 %v303
        %487 = vmatmul.mubr.bf16.gmra.mrb[0].mxu0 %v302
        %v488 = vpop.f32.mrb[0].mxu0
        %v489 = vadd.f32 0.0, %v488
        %v490 = vpop.f32.mrb[0].mxu0
        %v491 = vpop.f32.mrb[0].mxu0
        %v492 = vadd.f32 0.0, %v491
        %v493 = vpop.f32.mrb[0].mxu0
        %494 = vmatprep.mubr.bf16.mxu0 %v305
        %495 = vmatmul.mubr.bf16.gmra.mrb[0].mxu0 %v304
        %v496 = vpop.f32.mrb[0].mxu0
        %v497 = vadd.f32 0.0, %v496
        %v498 = vpop.f32.mrb[0].mxu0
        %v499 = vpop.f32.mrb[0].mxu0
        %v500 = vadd.f32 0.0, %v499
        %v501 = vpop.f32.mrb[0].mxu0
        %502 = vmatprep.mubr.bf16.mxu0 %v307
        %503 = vmatmul.mubr.bf16.gmra.mrb[0].mxu0 %v306
        %v504 = vpop.f32.mrb[0].mxu0
        %v505 = vadd.f32 0.0, %v504
        %v506 = vpop.f32.mrb[0].mxu0
        %v507 = vpop.f32.mrb[0].mxu0
        %v508 = vadd.f32 0.0, %v507
        %v509 = vpop.f32.mrb[0].mxu0
        %510 = vmatprep.mubr.bf16.mxu0 %v309
        %511 = vmatmul.mubr.bf16.gmra.mrb[0].mxu0 %v308
        %v512 = vpop.f32.mrb[0].mxu0
        %v513 = vadd.f32 0.0, %v512
        %v514 = vpop.f32.mrb[0].mxu0
        %v515 = vpop.f32.mrb[0].mxu0
        %v516 = vadd.f32 0.0, %v515
        %v517 = vpop.f32.mrb[0].mxu0
        %518 = vdwg.mxu0
        %p519 = scmp.eq.s32.totalorder %s25, 0
        // Predicated region
        $region37: #{tpu_custom_call.1} parent=27 // pred_check
          %p520 = pneg %p519
        $region38: #{tpu_custom_call.1} parent=27 // pred_check_branch
          %522 = sbr.rel (%p520) target = $region40
        $region39: #{tpu_custom_call.1} parent=27 // pred_region
          %523 = vst [vmem:[%s193] sm:$0xff] %v457
          %524 = vst [vmem:[%s193 + $0x8] sm:$0xff] %v460
          %525 = vst [vmem:[%s193 + $0x10] sm:$0xff] %v465
          %526 = vst [vmem:[%s193 + $0x18] sm:$0xff] %v468
          %527 = vst [vmem:[%s193 + $0x20] sm:$0xff] %v473
          %528 = vst [vmem:[%s193 + $0x28] sm:$0xff] %v476
          %529 = vst [vmem:[%s193 + $0x30] sm:$0xff] %v481
          %530 = vst [vmem:[%s193 + $0x38] sm:$0xff] %v484
          %531 = vst [vmem:[%s193 + $0x40] sm:$0xff] %v489
          %532 = vst [vmem:[%s193 + $0x48] sm:$0xff] %v492
          %533 = vst [vmem:[%s193 + $0x50] sm:$0xff] %v497
          %534 = vst [vmem:[%s193 + $0x58] sm:$0xff] %v500
          %535 = vst [vmem:[%s193 + $0x60] sm:$0xff] %v505
          %536 = vst [vmem:[%s193 + $0x68] sm:$0xff] %v508
          %537 = vst [vmem:[%s193 + $0x70] sm:$0xff] %v513
          %538 = vst [vmem:[%s193 + $0x78] sm:$0xff] %v516
        $region40: #{tpu_custom_call.1} parent=27 // pred_fallthru
          _
        %p539 = scmp.ne.s32.totalorder %s25, 0
        // Predicated region
        $region41: #{tpu_custom_call.1} parent=27 // pred_check
          %p540 = pneg %p539
        $region42: #{tpu_custom_call.1} parent=27 // pred_check_branch
          %542 = sbr.rel (%p540) target = $region44
        $region43: #{tpu_custom_call.1} parent=27 // pred_region
          %v543 = vld [vmem:[%s193] sm:$0xff]
          %v544 = vld [vmem:[%s193 + $0x8] sm:$0xff]
          %v545 = vld [vmem:[%s193 + $0x10] sm:$0xff]
          %v546 = vld [vmem:[%s193 + $0x18] sm:$0xff]
          %v547 = vld [vmem:[%s193 + $0x20] sm:$0xff]
          %v548 = vld [vmem:[%s193 + $0x28] sm:$0xff]
          %v549 = vld [vmem:[%s193 + $0x30] sm:$0xff]
          %v550 = vld [vmem:[%s193 + $0x38] sm:$0xff]
          %v551 = vld [vmem:[%s193 + $0x40] sm:$0xff]
          %v552 = vld [vmem:[%s193 + $0x48] sm:$0xff]
          %v553 = vld [vmem:[%s193 + $0x50] sm:$0xff]
          %v554 = vld [vmem:[%s193 + $0x58] sm:$0xff]
          %v555 = vld [vmem:[%s193 + $0x60] sm:$0xff]
          %v556 = vld [vmem:[%s193 + $0x68] sm:$0xff]
          %v557 = vld [vmem:[%s193 + $0x70] sm:$0xff]
          %v558 = vld [vmem:[%s193 + $0x78] sm:$0xff]
          %v559 = vadd.f32 %v543, %v457
          %v560 = vadd.f32 %v544, %v460
          %v561 = vadd.f32 %v545, %v465
          %v562 = vadd.f32 %v546, %v468
          %v563 = vadd.f32 %v547, %v473
          %v564 = vadd.f32 %v548, %v476
          %v565 = vadd.f32 %v549, %v481
          %v566 = vadd.f32 %v550, %v484
          %v567 = vadd.f32 %v551, %v489
          %v568 = vadd.f32 %v552, %v492
          %v569 = vadd.f32 %v553, %v497
          %v570 = vadd.f32 %v554, %v500
          %v571 = vadd.f32 %v555, %v505
          %v572 = vadd.f32 %v556, %v508
          %v573 = vadd.f32 %v557, %v513
          %v574 = vadd.f32 %v558, %v516
          %575 = vst [vmem:[%s193] sm:$0xff] %v559
          %576 = vst [vmem:[%s193 + $0x8] sm:$0xff] %v560
          %577 = vst [vmem:[%s193 + $0x10] sm:$0xff] %v561
          %578 = vst [vmem:[%s193 + $0x18] sm:$0xff] %v562
          %579 = vst [vmem:[%s193 + $0x20] sm:$0xff] %v563
          %580 = vst [vmem:[%s193 + $0x28] sm:$0xff] %v564
          %581 = vst [vmem:[%s193 + $0x30] sm:$0xff] %v565
          %582 = vst [vmem:[%s193 + $0x38] sm:$0xff] %v566
          %583 = vst [vmem:[%s193 + $0x40] sm:$0xff] %v567
          %584 = vst [vmem:[%s193 + $0x48] sm:$0xff] %v568
          %585 = vst [vmem:[%s193 + $0x50] sm:$0xff] %v569
          %586 = vst [vmem:[%s193 + $0x58] sm:$0xff] %v570
          %587 = vst [vmem:[%s193 + $0x60] sm:$0xff] %v571
          %588 = vst [vmem:[%s193 + $0x68] sm:$0xff] %v572
          %589 = vst [vmem:[%s193 + $0x70] sm:$0xff] %v573
          %590 = vst [vmem:[%s193 + $0x78] sm:$0xff] %v574
        $region44: #{tpu_custom_call.1} parent=27 // pred_fallthru
          _
        %s591 = sand.u32 %s89, 1
        %s592 = scalar_lea.sflag [#allocation4], %s591
        %s593 = sand.u32 %s89, 1
        %s594 = smul.addr %s593, 128
        %s595 = scalar_lea.vmem [#allocation7], %s594
        // Predicated region
        $region45: #{tpu_custom_call.1} parent=27 // pred_check
          %p596 = pneg %p99
        $region46: #{tpu_custom_call.1} parent=27 // pred_check_branch
          %598 = sbr.rel (%p596) target = $region48
        $region47: #{tpu_custom_call.1} parent=27 // pred_region
          %s599 = smul.u32 16, %s24
          %s601 = ssub.s32 2048, 2048
          %602 = vsyncadd %s592, %s601
          %s603 = smul.addr %s599, 128
          %s604 = scalar_lea.hbm %s2, %s603
          %s605 = sshll.u32 %s595, 4
          %s606 = int_to_ptr.vmem [resolvable:$true] %s605
          %611 = dma.vmem_to_hbm [thread:$0]  %s606, 2048, %s604, %s592, 128, 128, 8
        $region48: #{tpu_custom_call.1} parent=27 // pred_fallthru
          _
      $region28: #{tpu_custom_call.1} parent=5 // pred_fallthru
        _
      %p612 = scmp.le.s32.totalorder 2, %s15
      // Predicated region
      $region49: #{tpu_custom_call.1} parent=5 // pred_check
        %p613 = pneg %p612
      $region50: #{tpu_custom_call.1} parent=5 // pred_check_branch
        %615 = sbr.rel (%p613) target = $region52
      $region51: #{tpu_custom_call.1} parent=5 // pred_region
        %s616 = ssub.s32 %s15, 2
        // Predicated region
        $region53: #{tpu_custom_call.1} parent=51 // pred_check
          %p617 = pneg %p105
        $region54: #{tpu_custom_call.1} parent=51 // pred_check_branch
          %619 = sbr.rel (%p617) target = $region56
        $region55: #{tpu_custom_call.1} parent=51 // pred_region
          %s620 = sand.u32 %s90, 1
          %s621 = scalar_lea.sflag [#allocation4], %s620
          %s622 = sand.u32 %s90, 1
          %s623 = smul.addr %s622, 128
          %s624 = scalar_lea.vmem [#allocation7], %s623
          %625 = dma.done %s621, 2048
        $region56: #{tpu_custom_call.1} parent=51 // pred_fallthru
          _
      $region52: #{tpu_custom_call.1} parent=5 // pred_fallthru
        _
    $region6: #{tpu_custom_call.1} parent=1 // loop_footer
      %s19 = sadd.s32 1, %s15
    $region7: #{tpu_custom_call.1} parent=1 // loop_footer_branch
      %14 = sbr.rel target = $region3
    $region8: #{tpu_custom_call.1} parent=1 // loop_exit
      _
    %626 = vsyncpa [#allocation3], 1
    %s627 = scalar_lea.sflag [#allocation3], 1
    %628 = vsyncpa %s627, 1
    %629 = vsyncpa [#allocation6], 1
    %630 = vsyncpa [#allocation4], 1
    %s631 = scalar_lea.sflag [#allocation4], 1
    %632 = vsyncpa %s631, 1

</llo_original>
